<compile_context>
chip_gen: v5e
topology: v5e:2x2
jax: 0.10.0
libtpu: 0.0.40
codegen_flags: <defaults>
</compile_context>

<pallas_src>
import jax
import jax.numpy as jnp
from jax.experimental import pallas as pl
from jax.experimental.pallas import tpu as pltpu


def _round_up(x, m):
    return ((x + m - 1) // m) * m


def _vmem_budget_bytes():
    """Generation-aware usable-VMEM budget (bytes)."""
    cap = 64 << 20  # conservative default (v7x per-TC)
    try:
        info = pltpu.get_tpu_info()
        cap = int(getattr(info, "vmem_capacity_bytes", cap) or cap)
    except Exception:
        pass
    if cap >= (128 << 20):
        return 100 << 20        # v5e / v6e: 128 MiB physical
    return 48 << 20             # v7x: 64 MiB/TC, leave compiler headroom


def ffn_kernel(x_ref, w1_ref, b1_ref, w2_ref, b2_ref, o_ref, acc_ref):
    """One (row-tile, hidden-tile) grid step.

    h    = relu(x @ W1[:, jh] + b1[jh])          (f32)
    acc += h @ W2[jh, :]                         (f32 VMEM accumulator)
    last hidden tile:  out = acc + b2            (cast to output dtype)
    """
    jh = pl.program_id(1)

    @pl.when(jh == 0)
    def _init():
        acc_ref[...] = jnp.zeros_like(acc_ref)

    # Cast the activation tile to the weight dtype so BOTH matmuls run at the
    # bf16 MXU rate when weights_dtype=bf16; accumulation stays f32.
    x = x_ref[...].astype(w1_ref.dtype)
    h = jnp.dot(x, w1_ref[...], preferred_element_type=jnp.float32)
    h = jnp.maximum(h + b1_ref[...], 0.0)                       # bias+ReLU in f32
    acc_ref[...] += jnp.dot(h.astype(w2_ref.dtype), w2_ref[...],
                            preferred_element_type=jnp.float32)

    @pl.when(jh == pl.num_programs(1) - 1)
    def _finalize():
        o_ref[...] = (acc_ref[...] + b2_ref[...]).astype(o_ref.dtype)


def _choose_tiles(N, C, H, x_isz, o_isz, w_isz, vmem_budget,
                  max_tile_n=None, max_tile_h=None):
    lane = 128
    hp_lane = _round_up(H, lane)

    # Hidden-dim tile: prefer fully resident (single-buffered) weights,
    # otherwise stream lane-aligned H tiles (double-buffered).
    resident_bytes = 2 * C * hp_lane * w_isz + (hp_lane + C) * 4
    if resident_bytes <= int(0.6 * vmem_budget) and (
            max_tile_h is None or hp_lane <= max_tile_h):
        tile_h = hp_lane
    else:
        per_lane_col = 2 * (2 * C * w_isz + 4)   # 2 bufs x (W1 col + W2 row + b1)
        tile_h = (int(0.5 * vmem_budget) // max(per_lane_col, 1)) // lane * lane
        tile_h = max(lane, min(tile_h, hp_lane))
        if max_tile_h is not None:
            tile_h = max(lane, min(tile_h, _round_up(max_tile_h, lane)))
    Hp = _round_up(H, tile_h)
    h_steps = Hp // tile_h
    weights_resident = h_steps == 1

    # Row tile from the remaining budget (x/out double-buffered, acc + h temps).
    nbuf_w = 1 if weights_resident else 2
    w_bytes = nbuf_w * (2 * C * tile_h * w_isz + (tile_h + C) * 4)
    per_row = 2 * C * x_isz + 2 * C * o_isz + C * 4 + tile_h * 4
    remaining = max(vmem_budget - w_bytes, per_row * 8)
    cap = 1024 if vmem_budget > (64 << 20) else 512
    if max_tile_n is not None:
        cap = min(cap, max_tile_n)
    tile_n = min(cap, remaining // per_row)
    if tile_n >= N:
        tile_n = N                         # single row block (full-dim rule)
    else:
        tile_n = max(8, (tile_n // 8) * 8)  # multiple of 8, ragged last block
    return tile_n, tile_h, Hp, h_steps, weights_resident


def _weight_spec(shape, index_map, single_buffer):
    """BlockSpec for a weight/bias operand; single-buffer when fetched once."""
    if single_buffer:
        try:
            return pl.BlockSpec(shape, index_map, pipeline_mode=pl.Buffered(1))
        except Exception:
            pass  # older API without pipeline_mode -> default buffering
    return pl.BlockSpec(shape, index_map)


def ffn_pallas(x, w1, b1, w2, b2, *, weights_dtype=None,
               max_tile_n=None, max_tile_h=None):
    """x: [..., C];  w1: [C, H];  b1: [H];  w2: [H, C];  b2: [C].

    weights_dtype: e.g. jnp.bfloat16 on v6e/v7x -> both matmuls run at bf16
    MXU rate (activations cast per-tile in-kernel); bias/ReLU/accumulation
    stay f32.  max_tile_n / max_tile_h are testing/tuning overrides.
    """
    orig_shape = x.shape
    C = orig_shape[-1]
    H = w1.shape[1]
    assert w1.shape == (C, H) and w2.shape == (H, C)
    assert b1.shape == (H,) and b2.shape == (C,)

    if weights_dtype is not None:
        w1 = w1.astype(weights_dtype)
        w2 = w2.astype(weights_dtype)

    x2d = x.reshape(-1, C)          # metadata-only, no HBM pass
    N = x2d.shape[0]

    x_isz = jnp.dtype(x.dtype).itemsize
    o_isz = x_isz
    w_isz = jnp.dtype(w1.dtype).itemsize
    vmem_budget = _vmem_budget_bytes()

    tile_n, tile_h, Hp, h_steps, weights_resident = _choose_tiles(
        N, C, H, x_isz, o_isz, w_isz, vmem_budget, max_tile_n, max_tile_h)

    # Zero-pad ONLY the (small, one-time) weights/biases along H (exact:
    # padded W1 cols give relu(0)=0, padded W2 rows contribute 0).
    if Hp != H:
        w1 = jnp.pad(w1, ((0, 0), (0, Hp - H)))
        w2 = jnp.pad(w2, ((0, Hp - H), (0, 0)))
        b1_p = jnp.pad(b1.astype(jnp.float32), (0, Hp - H))
    else:
        b1_p = b1.astype(jnp.float32)
    b1_p = b1_p.reshape(1, Hp)
    b2_p = b2.astype(jnp.float32).reshape(1, C)

    n_row_tiles = pl.cdiv(N, tile_n)
    grid = (n_row_tiles, h_steps)

    # VMEM estimate (conservative: 2 weight buffers, covers the fallback).
    vmem_est = (2 * tile_n * C * (x_isz + o_isz)       # x/out double-buffered
                + tile_n * C * 4                        # f32 accumulator
                + tile_n * tile_h * 4                   # f32 h intermediate
                + 2 * (2 * C * tile_h * w_isz + (tile_h + C) * 4))
    vmem_limit = int(min(vmem_budget, max(int(vmem_est * 1.4) + (2 << 20), 4 << 20)))

    # True streamed bytes (weights re-streamed per row tile only when H-tiled).
    w_stream = 2 * C * Hp * w_isz + (Hp + C) * 4
    if h_steps > 1:
        w_stream *= n_row_tiles
    cost = pl.CostEstimate(
        flops=4 * N * C * Hp,                # two matmuls, 2*M*K*N each
        transcendentals=0,
        bytes_accessed=N * C * (x_isz + o_isz) + w_stream,
    )

    def build(single_buffer):
        in_specs = [
            pl.BlockSpec((tile_n, C), lambda i, j: (i, 0)),            # x tile
            _weight_spec((C, tile_h), lambda i, j: (0, j), single_buffer),   # W1
            _weight_spec((1, tile_h), lambda i, j: (0, j), single_buffer),   # b1
            _weight_spec((tile_h, C), lambda i, j: (j, 0), single_buffer),   # W2
            _weight_spec((1, C), lambda i, j: (0, 0), single_buffer),        # b2
        ]
        return pl.pallas_call(
            ffn_kernel,
            out_shape=jax.ShapeDtypeStruct((N, C), x.dtype),
            grid_spec=pltpu.PrefetchScalarGridSpec(
                num_scalar_prefetch=0,
                grid=grid,
                in_specs=in_specs,
                out_specs=pl.BlockSpec((tile_n, C), lambda i, j: (i, 0)),
                scratch_shapes=[pltpu.VMEM((tile_n, C), jnp.float32)],
            ),
            compiler_params=pltpu.CompilerParams(
                dimension_semantics=("parallel", "arbitrary"),
                vmem_limit_bytes=vmem_limit,
            ),
            cost_estimate=cost,
        )

    use_single_buffer = weights_resident
    try:
        out2d = build(use_single_buffer)(x2d, w1, b1_p, w2, b2_p)
    except Exception:
        if not use_single_buffer:
            raise
        # Fallback: default (double) buffering if Buffered(1) is rejected.
        out2d = build(False)(x2d, w1, b1_p, w2, b2_p)

    return out2d.reshape(orig_shape)


def init_ffn_params(key, inchannels, hiddensize, dtype=jnp.float32):
    """Deterministic init mimicking nn.Linear's uniform(-1/sqrt(fan_in), +)."""
    k1, k2, k3, k4 = jax.random.split(key, 4)
    bound1 = 1.0 / (inchannels ** 0.5)
    bound2 = 1.0 / (hiddensize ** 0.5)
    # Stored transposed vs PyTorch: W1 is [in, hidden], W2 is [hidden, in].
    w1 = jax.random.uniform(k1, (inchannels, hiddensize), dtype, -bound1, bound1)
    b1 = jax.random.uniform(k2, (hiddensize,), dtype, -bound1, bound1)
    w2 = jax.random.uniform(k3, (hiddensize, inchannels), dtype, -bound2, bound2)
    b2 = jax.random.uniform(k4, (inchannels,), dtype, -bound2, bound2)
    return w1, b1, w2, b2


def ffn_reference(x, w1, b1, w2, b2):
    h = jnp.maximum(x @ w1 + b1, 0.0)
    return h @ w2 + b2


if __name__ == "__main__":
    key = jax.random.PRNGKey(0)
    kx1, kp1, kx2, kp2, kx3, kp3 = jax.random.split(key, 6)

    # Case 1: small shapes matching the module; single tile, resident weights.
    B, S, C, H = 2, 8, 32, 64
    x = jax.random.normal(kx1, (B, S, C), dtype=jnp.float32)
    w1, b1, w2, b2 = init_ffn_params(kp1, C, H)
    out = jax.block_until_ready(ffn_pallas(x, w1, b1, w2, b2))
    ref = ffn_reference(x, w1, b1, w2, b2)
    assert out.shape == x.shape
    assert jnp.allclose(out, ref, atol=1e-4, rtol=1e-4), "case 1 mismatch"

    # Case 2: unaligned C/H, no wrapper padding of activations.
    B2, S2, C2, H2 = 2, 300, 48, 96
    x2 = jax.random.normal(kx2, (B2, S2, C2), dtype=jnp.float32)
    p2 = init_ffn_params(kp2, C2, H2)
    out2 = jax.block_until_ready(ffn_pallas(x2, *p2))
    ref2 = ffn_reference(x2, *p2)
    assert out2.shape == x2.shape
    assert jnp.allclose(out2, ref2, atol=1e-4, rtol=1e-4), "case 2 mismatch"

    # Case 3: force a multi-step row grid with a ragged last block (600 rows,
    # tile 128 -> 5 blocks, last one masked).
    out3 = jax.block_until_ready(ffn_pallas(x2, *p2, max_tile_n=128))
    assert jnp.allclose(out3, ref2, atol=1e-4, rtol=1e-4), "case 3 mismatch"

    # Case 4: force the hidden-dim reduction axis (h_steps > 1, f32 accumulator).
    B3, S3, C3, H3 = 4, 64, 32, 256
    x3 = jax.random.normal(kx3, (B3, S3, C3), dtype=jnp.float32)
    p3 = init_ffn_params(kp3, C3, H3)
    out4 = jax.block_until_ready(
        ffn_pallas(x3, *p3, max_tile_n=128, max_tile_h=128))
    ref4 = ffn_reference(x3, *p3)
    assert jnp.allclose(out4, ref4, atol=1e-4, rtol=1e-4), "case 4 mismatch"

    # Case 5: bf16 weights path (both matmuls at bf16 MXU rate, f32 accum).
    out5 = jax.block_until_ready(
        ffn_pallas(x, w1, b1, w2, b2, weights_dtype=jnp.bfloat16))
    assert jnp.allclose(out5, ref, atol=5e-2, rtol=5e-2), "case 5 mismatch"

    print("KERNEL_OK")
</pallas_src>

<mosaic_0001>
module attributes {stable_mosaic.version = 11 : i64} {
  func.func @ffn_kernel(%arg0: i32, %arg1: i32, %arg2: memref<16x32xf32, #tpu.memory_space<vmem>>, %arg3: memref<32x128xf32, #tpu.memory_space<vmem>>, %arg4: memref<1x128xf32, #tpu.memory_space<vmem>>, %arg5: memref<128x32xf32, #tpu.memory_space<vmem>>, %arg6: memref<1x32xf32, #tpu.memory_space<vmem>>, %arg7: memref<16x32xf32, #tpu.memory_space<vmem>>, %arg8: memref<16x32xf32, #tpu.memory_space<vmem>>) attributes {dimension_semantics = [#tpu.dimension_semantics<parallel>, #tpu.dimension_semantics<arbitrary>], iteration_bounds = array<i64: 1, 1>, scalar_prefetch = 0 : i64, scratch_operands = 1 : i64, tpu.core_type = #tpu.core_type<tc>, window_params = [{transform_indices = @transform_0, window_bounds = array<i64: 16, 32>}, {pipeline_mode = #tpu.pipeline_mode<synchronous>, transform_indices = @transform_1, window_bounds = array<i64: 32, 128>}, {pipeline_mode = #tpu.pipeline_mode<synchronous>, transform_indices = @transform_2, window_bounds = array<i64: 1, 128>}, {pipeline_mode = #tpu.pipeline_mode<synchronous>, transform_indices = @transform_3, window_bounds = array<i64: 128, 32>}, {pipeline_mode = #tpu.pipeline_mode<synchronous>, transform_indices = @transform_4, window_bounds = array<i64: 1, 32>}, {transform_indices = @transform_5, window_bounds = array<i64: 16, 32>}]} {
    %c0_i32 = arith.constant 0 : i32
    %0 = arith.cmpi eq, %arg1, %c0_i32 : i32
    %1 = arith.extui %0 : i1 to i32
    %c0_i32_0 = arith.constant 0 : i32
    %2 = arith.cmpi ne, %1, %c0_i32_0 : i32
    scf.if %2 {
      %cst_16 = arith.constant 0.000000e+00 : f32
      %19 = vector.broadcast %cst_16 : f32 to vector<16x32xf32>
      %c0_17 = arith.constant 0 : index
      %c0_18 = arith.constant 0 : index
      %20 = vector.load %arg8[%c0_17, %c0_18] : memref<16x32xf32, #tpu.memory_space<vmem>>, vector<16x32xf32>
      tpu.vector_store %arg8[%c0_17, %c0_18], %19 {strides = array<i32>} : memref<16x32xf32, #tpu.memory_space<vmem>>, vector<16x32xf32>,
    } else {
    }
    %c0 = arith.constant 0 : index
    %c0_1 = arith.constant 0 : index
    %3 = vector.load %arg2[%c0, %c0_1] : memref<16x32xf32, #tpu.memory_space<vmem>>, vector<16x32xf32>
    %c0_2 = arith.constant 0 : index
    %c0_3 = arith.constant 0 : index
    %4 = vector.load %arg3[%c0_2, %c0_3] : memref<32x128xf32, #tpu.memory_space<vmem>>, vector<32x128xf32>
    %cst = arith.constant dense<0.000000e+00> : vector<16x128xf32>
    %5 = tpu.matmul %3, %4, %cst {dimension_numbers = #tpu.dot_dimension_numbers<[1], [0], [0], [1], [0, 0, 1, 1], [], []>} : vector<16x32xf32>, vector<32x128xf32>, vector<16x128xf32> -> vector<16x128xf32>
    %c0_4 = arith.constant 0 : index
    %c0_5 = arith.constant 0 : index
    %6 = vector.load %arg4[%c0_4, %c0_5] : memref<1x128xf32, #tpu.memory_space<vmem>>, vector<1x128xf32>
    %7 = vector.broadcast %6 : vector<1x128xf32> to vector<16x128xf32>
    %8 = arith.addf %5, %7 : vector<16x128xf32>
    %cst_6 = arith.constant 0.000000e+00 : f32
    %9 = vector.broadcast %cst_6 : f32 to vector<16x128xf32>
    %10 = arith.maximumf %8, %9 : vector<16x128xf32>
    %c0_7 = arith.constant 0 : index
    %c0_8 = arith.constant 0 : index
    %11 = vector.load %arg8[%c0_7, %c0_8] : memref<16x32xf32, #tpu.memory_space<vmem>>, vector<16x32xf32>
    %c0_9 = arith.constant 0 : index
    %c0_10 = arith.constant 0 : index
    %12 = vector.load %arg5[%c0_9, %c0_10] : memref<128x32xf32, #tpu.memory_space<vmem>>, vector<128x32xf32>
    %cst_11 = arith.constant dense<0.000000e+00> : vector<16x32xf32>
    %13 = tpu.matmul %10, %12, %cst_11 {dimension_numbers = #tpu.dot_dimension_numbers<[1], [0], [0], [1], [0, 0, 1, 1], [], []>} : vector<16x128xf32>, vector<128x32xf32>, vector<16x32xf32> -> vector<16x32xf32>
    %14 = arith.addf %11, %13 : vector<16x32xf32>
    %c0_12 = arith.constant 0 : index
    %c0_13 = arith.constant 0 : index
    %15 = vector.load %arg8[%c0_12, %c0_13] : memref<16x32xf32, #tpu.memory_space<vmem>>, vector<16x32xf32>
    tpu.vector_store %arg8[%c0_12, %c0_13], %14 {strides = array<i32>} : memref<16x32xf32, #tpu.memory_space<vmem>>, vector<16x32xf32>,
    %c0_i32_14 = arith.constant 0 : i32
    %16 = arith.cmpi eq, %arg1, %c0_i32_14 : i32
    %17 = arith.extui %16 : i1 to i32
    %c0_i32_15 = arith.constant 0 : i32
    %18 = arith.cmpi ne, %17, %c0_i32_15 : i32
    scf.if %18 {
      %c0_16 = arith.constant 0 : index
      %c0_17 = arith.constant 0 : index
      %19 = vector.load %arg8[%c0_16, %c0_17] : memref<16x32xf32, #tpu.memory_space<vmem>>, vector<16x32xf32>
      %c0_18 = arith.constant 0 : index
      %c0_19 = arith.constant 0 : index
      %20 = vector.load %arg6[%c0_18, %c0_19] : memref<1x32xf32, #tpu.memory_space<vmem>>, vector<1x32xf32>
      %21 = vector.broadcast %20 : vector<1x32xf32> to vector<16x32xf32>
      %22 = arith.addf %19, %21 : vector<16x32xf32>
      %c0_20 = arith.constant 0 : index
      %c0_21 = arith.constant 0 : index
      %23 = vector.load %arg7[%c0_20, %c0_21] : memref<16x32xf32, #tpu.memory_space<vmem>>, vector<16x32xf32>
      tpu.vector_store %arg7[%c0_20, %c0_21], %22 {strides = array<i32>} : memref<16x32xf32, #tpu.memory_space<vmem>>, vector<16x32xf32>,
    } else {
    }
    return
  }
  func.func @transform_0(%arg0: i32, %arg1: i32) -> (i32, i32) {
    %c0_i32 = arith.constant 0 : i32
    %c0_i32_0 = arith.constant 0 : i32
    return %arg0, %c0_i32 : i32, i32
  }
  func.func @transform_1(%arg0: i32, %arg1: i32) -> (i32, i32) {
    %c0_i32 = arith.constant 0 : i32
    %c0_i32_0 = arith.constant 0 : i32
    return %c0_i32, %arg1 : i32, i32
  }
  func.func @transform_2(%arg0: i32, %arg1: i32) -> (i32, i32) {
    %c0_i32 = arith.constant 0 : i32
    %c0_i32_0 = arith.constant 0 : i32
    return %c0_i32, %arg1 : i32, i32
  }
  func.func @transform_3(%arg0: i32, %arg1: i32) -> (i32, i32) {
    %c0_i32 = arith.constant 0 : i32
    %c0_i32_0 = arith.constant 0 : i32
    return %arg1, %c0_i32 : i32, i32
  }
  func.func @transform_4(%arg0: i32, %arg1: i32) -> (i32, i32) {
    %c0_i32 = arith.constant 0 : i32
    %c0_i32_0 = arith.constant 0 : i32
    %c0_i32_1 = arith.constant 0 : i32
    return %c0_i32, %c0_i32_0 : i32, i32
  }
  func.func @transform_5(%arg0: i32, %arg1: i32) -> (i32, i32) {
    %c0_i32 = arith.constant 0 : i32
    %c0_i32_0 = arith.constant 0 : i32
    return %arg0, %c0_i32 : i32, i32
  }
}

module attributes {stable_mosaic.version = 11 : i64} {
  func.func @ffn_kernel(%arg0: i32, %arg1: i32, %arg2: memref<16x32xf32, #tpu.memory_space<vmem>>, %arg3: memref<32x128xf32, #tpu.memory_space<vmem>>, %arg4: memref<1x128xf32, #tpu.memory_space<vmem>>, %arg5: memref<128x32xf32, #tpu.memory_space<vmem>>, %arg6: memref<1x32xf32, #tpu.memory_space<vmem>>, %arg7: memref<16x32xf32, #tpu.memory_space<vmem>>, %arg8: memref<16x32xf32, #tpu.memory_space<vmem>>) attributes {dimension_semantics = [#tpu.dimension_semantics<parallel>, #tpu.dimension_semantics<arbitrary>], iteration_bounds = array<i64: 1, 1>, scalar_prefetch = 0 : i64, scratch_operands = 1 : i64, tpu.core_type = #tpu.core_type<tc>, window_params = [{transform_indices = @transform_0, window_bounds = array<i64: 16, 32>}, {transform_indices = @transform_1, window_bounds = array<i64: 32, 128>}, {transform_indices = @transform_2, window_bounds = array<i64: 1, 128>}, {transform_indices = @transform_3, window_bounds = array<i64: 128, 32>}, {pipeline_mode = #tpu.pipeline_mode<synchronous>, transform_indices = @transform_4, window_bounds = array<i64: 1, 32>}, {transform_indices = @transform_5, window_bounds = array<i64: 16, 32>}]} {
    %c0_i32 = arith.constant 0 : i32
    %0 = arith.cmpi eq, %arg1, %c0_i32 : i32
    %1 = arith.extui %0 : i1 to i32
    %c0_i32_0 = arith.constant 0 : i32
    %2 = arith.cmpi ne, %1, %c0_i32_0 : i32
    scf.if %2 {
      %cst_16 = arith.constant 0.000000e+00 : f32
      %19 = vector.broadcast %cst_16 : f32 to vector<16x32xf32>
      %c0_17 = arith.constant 0 : index
      %c0_18 = arith.constant 0 : index
      %20 = vector.load %arg8[%c0_17, %c0_18] : memref<16x32xf32, #tpu.memory_space<vmem>>, vector<16x32xf32>
      tpu.vector_store %arg8[%c0_17, %c0_18], %19 {strides = array<i32>} : memref<16x32xf32, #tpu.memory_space<vmem>>, vector<16x32xf32>,
    } else {
    }
    %c0 = arith.constant 0 : index
    %c0_1 = arith.constant 0 : index
    %3 = vector.load %arg2[%c0, %c0_1] : memref<16x32xf32, #tpu.memory_space<vmem>>, vector<16x32xf32>
    %c0_2 = arith.constant 0 : index
    %c0_3 = arith.constant 0 : index
    %4 = vector.load %arg3[%c0_2, %c0_3] : memref<32x128xf32, #tpu.memory_space<vmem>>, vector<32x128xf32>
    %cst = arith.constant dense<0.000000e+00> : vector<16x128xf32>
    %5 = tpu.matmul %3, %4, %cst {dimension_numbers = #tpu.dot_dimension_numbers<[1], [0], [0], [1], [0, 0, 1, 1], [], []>} : vector<16x32xf32>, vector<32x128xf32>, vector<16x128xf32> -> vector<16x128xf32>
    %c0_4 = arith.constant 0 : index
    %c0_5 = arith.constant 0 : index
    %6 = vector.load %arg4[%c0_4, %c0_5] : memref<1x128xf32, #tpu.memory_space<vmem>>, vector<1x128xf32>
    %7 = vector.broadcast %6 : vector<1x128xf32> to vector<16x128xf32>
    %8 = arith.addf %5, %7 : vector<16x128xf32>
    %cst_6 = arith.constant 0.000000e+00 : f32
    %9 = vector.broadcast %cst_6 : f32 to vector<16x128xf32>
    %10 = arith.maximumf %8, %9 : vector<16x128xf32>
    %c0_7 = arith.constant 0 : index
    %c0_8 = arith.constant 0 : index
    %11 = vector.load %arg8[%c0_7, %c0_8] : memref<16x32xf32, #tpu.memory_space<vmem>>, vector<16x32xf32>
    %c0_9 = arith.constant 0 : index
    %c0_10 = arith.constant 0 : index
    %12 = vector.load %arg5[%c0_9, %c0_10] : memref<128x32xf32, #tpu.memory_space<vmem>>, vector<128x32xf32>
    %cst_11 = arith.constant dense<0.000000e+00> : vector<16x32xf32>
    %13 = tpu.matmul %10, %12, %cst_11 {dimension_numbers = #tpu.dot_dimension_numbers<[1], [0], [0], [1], [0, 0, 1, 1], [], []>} : vector<16x128xf32>, vector<128x32xf32>, vector<16x32xf32> -> vector<16x32xf32>
    %14 = arith.addf %11, %13 : vector<16x32xf32>
    %c0_12 = arith.constant 0 : index
    %c0_13 = arith.constant 0 : index
    %15 = vector.load %arg8[%c0_12, %c0_13] : memref<16x32xf32, #tpu.memory_space<vmem>>, vector<16x32xf32>
    tpu.vector_store %arg8[%c0_12, %c0_13], %14 {strides = array<i32>} : memref<16x32xf32, #tpu.memory_space<vmem>>, vector<16x32xf32>,
    %c0_i32_14 = arith.constant 0 : i32
    %16 = arith.cmpi eq, %arg1, %c0_i32_14 : i32
    %17 = arith.extui %16 : i1 to i32
    %c0_i32_15 = arith.constant 0 : i32
    %18 = arith.cmpi ne, %17, %c0_i32_15 : i32
    scf.if %18 {
      %c0_16 = arith.constant 0 : index
      %c0_17 = arith.constant 0 : index
      %19 = vector.load %arg8[%c0_16, %c0_17] : memref<16x32xf32, #tpu.memory_space<vmem>>, vector<16x32xf32>
      %c0_18 = arith.constant 0 : index
      %c0_19 = arith.constant 0 : index
      %20 = vector.load %arg6[%c0_18, %c0_19] : memref<1x32xf32, #tpu.memory_space<vmem>>, vector<1x32xf32>
      %21 = vector.broadcast %20 : vector<1x32xf32> to vector<16x32xf32>
      %22 = arith.addf %19, %21 : vector<16x32xf32>
      %c0_20 = arith.constant 0 : index
      %c0_21 = arith.constant 0 : index
      %23 = vector.load %arg7[%c0_20, %c0_21] : memref<16x32xf32, #tpu.memory_space<vmem>>, vector<16x32xf32>
      tpu.vector_store %arg7[%c0_20, %c0_21], %22 {strides = array<i32>} : memref<16x32xf32, #tpu.memory_space<vmem>>, vector<16x32xf32>,
    } else {
    }
    return
  }
  func.func @transform_0(%arg0: i32, %arg1: i32) -> (i32, i32) {
    %c0_i32 = arith.constant 0 : i32
    %c0_i32_0 = arith.constant 0 : i32
    return %arg0, %c0_i32 : i32, i32
  }
  func.func @transform_1(%arg0: i32, %arg1: i32) -> (i32, i32) {
    %c0_i32 = arith.constant 0 : i32
    %c0_i32_0 = arith.constant 0 : i32
    return %c0_i32, %arg1 : i32, i32
  }
  func.func @transform_2(%arg0: i32, %arg1: i32) -> (i32, i32) {
    %c0_i32 = arith.constant 0 : i32
    %c0_i32_0 = arith.constant 0 : i32
    return %c0_i32, %arg1 : i32, i32
  }
  func.func @transform_3(%arg0: i32, %arg1: i32) -> (i32, i32) {
    %c0_i32 = arith.constant 0 : i32
    %c0_i32_0 = arith.constant 0 : i32
    return %arg1, %c0_i32 : i32, i32
  }
  func.func @transform_4(%arg0: i32, %arg1: i32) -> (i32, i32) {
    %c0_i32 = arith.constant 0 : i32
    %c0_i32_0 = arith.constant 0 : i32
    %c0_i32_1 = arith.constant 0 : i32
    return %c0_i32, %c0_i32_0 : i32, i32
  }
  func.func @transform_5(%arg0: i32, %arg1: i32) -> (i32, i32) {
    %c0_i32 = arith.constant 0 : i32
    %c0_i32_0 = arith.constant 0 : i32
    return %arg0, %c0_i32 : i32, i32
  }
}

</mosaic_0001>

<llo_original>
// kernel: tpu_custom_call.1
$region0: #{tpu_custom_call.1}
  #allocation0 [shape = 'u32[]', space=smem, size = 0x4, offset = 0x4, fixed_abs, tag = 'smem constant byte address 0x4 - core index']
  #allocation1 [shape = 'u32[72,128]{1,0:T(1,128)}', space=vmem, size = 0x9000, scoped, tag = 'internal scratch']
  #allocation2 [shape = 'f32[16,32]{1,0:T(8,128)}', space=vmem, size = 0x2000, scoped, tag = 'scratch operand']
  %s0 = inlined_call_operand.vmem [shape: f32[16,32], index: 0, kind: input, shape index: {}]
  %s1 = inlined_call_operand.vmem [shape: f32[32,128], index: 1, kind: input, shape index: {}]
  %s2 = inlined_call_operand.vmem [shape: f32[1,128], index: 2, kind: input, shape index: {}]
  %s3 = inlined_call_operand.vmem [shape: f32[128,32], index: 3, kind: input, shape index: {}]
  %s4 = inlined_call_operand.vmem [shape: f32[1,32], index: 4, kind: input, shape index: {}]
  %s5 = inlined_call_operand.hbm [shape: f32[16,32], index: 5, kind: output, shape index: {}]
  %s6 = sld [smem:[#allocation0]]
  $region38: #{tpu_custom_call.1} parent=0
    _
  %s8 = ssub.s32 1, %s6
  %s9 = scalar_select 0, %s8, %s6
  $region1: #{tpu_custom_call.1} parent=0
    #allocation3 [shape = 'u8[8192]{0}', space=vmem, size = 0x2000, scoped, tag = 'output window, operand 0, single buffered']
    #allocation4 [shape = 's32[1]{0}', space=sflag, size = 0x4, scoped, tag = 'scoped memory for tpu_custom_call.1']
    %10 = vsyncpa [#allocation4], 0
    // Predicated region
    $region2: #{tpu_custom_call.1} parent=1 // pred_check
      _
    $region3: #{tpu_custom_call.1} parent=1 // pred_check_branch
      %12 = sbr.rel (0) target = $region5
    $region4: #{tpu_custom_call.1} parent=1 // pred_region
      _
    $region5: #{tpu_custom_call.1} parent=1 // pred_fallthru
      _
    // Predicated region
    $region6: #{tpu_custom_call.1} parent=1 // pred_check
      _
    $region7: #{tpu_custom_call.1} parent=1 // pred_check_branch
      %14 = sbr.rel (0) target = $region9
    $region8: #{tpu_custom_call.1} parent=1 // pred_region
      _
    $region9: #{tpu_custom_call.1} parent=1 // pred_fallthru
      _
    // Predicated region
    $region10: #{tpu_custom_call.1} parent=1 // pred_check
      _
    $region11: #{tpu_custom_call.1} parent=1 // pred_check_branch
      %16 = sbr.rel (0) target = $region13
    $region12: #{tpu_custom_call.1} parent=1 // pred_region
      _
    $region13: #{tpu_custom_call.1} parent=1 // pred_fallthru
      _
    // Predicated region
    $region14: #{tpu_custom_call.1} parent=1 // pred_check
      _
    $region15: #{tpu_custom_call.1} parent=1 // pred_check_branch
      %18 = sbr.rel (0) target = $region17
    $region16: #{tpu_custom_call.1} parent=1 // pred_region
      _
    $region17: #{tpu_custom_call.1} parent=1 // pred_fallthru
      _
    // Predicated region
    $region18: #{tpu_custom_call.1} parent=1 // pred_check
      _
    $region19: #{tpu_custom_call.1} parent=1 // pred_check_branch
      %20 = sbr.rel (0) target = $region21
    $region20: #{tpu_custom_call.1} parent=1 // pred_region
      _
    $region21: #{tpu_custom_call.1} parent=1 // pred_fallthru
      _
    %p21 = scmp.eq.s32.totalorder 0, 0
    // Predicated region
    $region22: #{tpu_custom_call.1} parent=1 // pred_check
      %p22 = pneg %p21
    $region23: #{tpu_custom_call.1} parent=1 // pred_check_branch
      %24 = sbr.rel (%p22) target = $region25
    $region24: #{tpu_custom_call.1} parent=1 // pred_region
      %vm25 = vcmask 261120
      %26 = vst.msk [vmem:[#allocation2] sm:$0xff] %vm25, 0.0
      %27 = vst.msk [vmem:[#allocation2 + $0x8] sm:$0xff] %vm25, 0.0
    $region25: #{tpu_custom_call.1} parent=1 // pred_fallthru
      _
    %v28 = vld [vmem:[%s0] sm:$0xff]
    %v29 = vld [vmem:[%s0 + $0x8] sm:$0xff]
    %v30 = vld [vmem:[%s1] sm:$0xff]
    %v31 = vld [vmem:[%s1 + $0x8] sm:$0xff]
    %v32 = vld [vmem:[%s1 + $0x10] sm:$0xff]
    %v33 = vld [vmem:[%s1 + $0x18] sm:$0xff]
    %v34 = vld [vmem:[%s2] sm:$0x1]
    %v36 = vperm.slane %v34, 0
    %vm38 = vcmask 261120
    %v40 = vsel %vm38, %v28, 0
    %v43 = vsel %vm38, %v29, 0
    %45 = vmatpush.msra.mxu0 0.0
    %46 = vmatpush.msra.mxu0 0.0
    %47 = vmatpush.msra.mxu0 0.0
    %48 = vmatpush.msra.mxu0 0.0
    %49 = vmatpush.msra.mxu0 0.0
    %50 = vmatpush.msra.mxu0 0.0
    %51 = vmatpush.msra.mxu0 0.0
    %52 = vmatpush.msra.mxu0 0.0
    %53 = vmatpush.msra.mxu0 0.0
    %54 = vmatpush.msra.mxu0 0.0
    %55 = vmatpush.msra.mxu0 0.0
    %56 = vmatpush.msra.mxu0 0.0
    %57 = vmatpush.msra.mxu0 %v33
    %58 = vmatpush.msra.mxu0 %v32
    %59 = vmatpush.msra.mxu0 %v31
    %60 = vmatpush.msra.mxu0 %v30
    %61 = vmatmul.f32.gmra.mxu0 %v40
    %v62 = vpop.f32.mrf.mxu0
    %v63 = vadd.f32 %v36, %v62
    %64 = vmatmul.f32.gmra.mxu0 %v43
    %v65 = vpop.f32.mrf.mxu0
    %v66 = vadd.f32 %v36, %v65
    %67 = vdwg.mxu0
    %v68 = vmax.f32 %v63, 0.0
    %v69 = vmax.f32 %v66, 0.0
    %v70 = vld [vmem:[#allocation2] sm:$0xff]
    %v71 = vld [vmem:[#allocation2 + $0x8] sm:$0xff]
    %v72 = vld [vmem:[%s3] sm:$0xff]
    %v73 = vld [vmem:[%s3 + $0x8] sm:$0xff]
    %v74 = vld [vmem:[%s3 + $0x10] sm:$0xff]
    %v75 = vld [vmem:[%s3 + $0x18] sm:$0xff]
    %v76 = vld [vmem:[%s3 + $0x20] sm:$0xff]
    %v77 = vld [vmem:[%s3 + $0x28] sm:$0xff]
    %v78 = vld [vmem:[%s3 + $0x30] sm:$0xff]
    %v79 = vld [vmem:[%s3 + $0x38] sm:$0xff]
    %v80 = vld [vmem:[%s3 + $0x40] sm:$0xff]
    %v81 = vld [vmem:[%s3 + $0x48] sm:$0xff]
    %v82 = vld [vmem:[%s3 + $0x50] sm:$0xff]
    %v83 = vld [vmem:[%s3 + $0x58] sm:$0xff]
    %v84 = vld [vmem:[%s3 + $0x60] sm:$0xff]
    %v85 = vld [vmem:[%s3 + $0x68] sm:$0xff]
    %v86 = vld [vmem:[%s3 + $0x70] sm:$0xff]
    %v87 = vld [vmem:[%s3 + $0x78] sm:$0xff]
    %88 = vmatpush.msra.mxu0 %v87
    %89 = vmatpush.msra.mxu0 %v86
    %90 = vmatpush.msra.mxu0 %v85
    %91 = vmatpush.msra.mxu0 %v84
    %92 = vmatpush.msra.mxu0 %v83
    %93 = vmatpush.msra.mxu0 %v82
    %94 = vmatpush.msra.mxu0 %v81
    %95 = vmatpush.msra.mxu0 %v80
    %96 = vmatpush.msra.mxu0 %v79
    %97 = vmatpush.msra.mxu0 %v78
    %98 = vmatpush.msra.mxu0 %v77
    %99 = vmatpush.msra.mxu0 %v76
    %100 = vmatpush.msra.mxu0 %v75
    %101 = vmatpush.msra.mxu0 %v74
    %102 = vmatpush.msra.mxu0 %v73
    %103 = vmatpush.msra.mxu0 %v72
    %104 = vmatmul.f32.gmra.mxu0 %v68
    %v105 = vpop.f32.mrf.mxu0
    %v106 = vadd.f32 0.0, %v105
    %107 = vmatmul.f32.gmra.mxu0 %v69
    %v108 = vpop.f32.mrf.mxu0
    %v109 = vadd.f32 0.0, %v108
    %110 = vdwg.mxu0
    %v111 = vadd.f32 %v70, %v106
    %v112 = vadd.f32 %v71, %v109
    %113 = vst.msk [vmem:[#allocation2] sm:$0xff] %vm38, %v111
    %114 = vst.msk [vmem:[#allocation2 + $0x8] sm:$0xff] %vm38, %v112
    // Predicated region
    $region26: #{tpu_custom_call.1} parent=1 // pred_check
      %p115 = pneg %p21
    $region27: #{tpu_custom_call.1} parent=1 // pred_check_branch
      %117 = sbr.rel (%p115) target = $region29
    $region28: #{tpu_custom_call.1} parent=1 // pred_region
      %v118 = vld [vmem:[#allocation2] sm:$0xff]
      %v119 = vld [vmem:[#allocation2 + $0x8] sm:$0xff]
      %v120 = vld [vmem:[%s4] sm:$0x1]
      %v122 = vperm.slane %v120, 0
      %v124 = vadd.f32 %v118, %v122
      %v125 = vadd.f32 %v119, %v122
      %126 = vst.msk [vmem:[#allocation3] sm:$0xff] %vm38, %v124
      %127 = vst.msk [vmem:[#allocation3 + $0x8] sm:$0xff] %vm38, %v125
    $region29: #{tpu_custom_call.1} parent=1 // pred_fallthru
      _
    // Predicated region
    $region30: #{tpu_custom_call.1} parent=1 // pred_check
      _
    $region31: #{tpu_custom_call.1} parent=1 // pred_check_branch
      %129 = sbr.rel (0) target = $region33
    $region32: #{tpu_custom_call.1} parent=1 // pred_region
      %131 = vsyncadd [#allocation4], 0
      %s132 = sshll.u32 [#allocation3], 4
      %s133 = int_to_ptr.vmem [resolvable:$true] %s132
      %s134 = sshll.u32 %s5, 4
      %s135 = int_to_ptr.hbm [resolvable:$true] %s134
      %140 = dma.vmem_to_hbm [thread:$0]  %s133, 256, %s135, [#allocation4], 128, 128, 8
    $region33: #{tpu_custom_call.1} parent=1 // pred_fallthru
      _
    // Predicated region
    $region34: #{tpu_custom_call.1} parent=1 // pred_check
      _
    $region35: #{tpu_custom_call.1} parent=1 // pred_check_branch
      %142 = sbr.rel (0) target = $region37
    $region36: #{tpu_custom_call.1} parent=1 // pred_region
      %144 = dma.done [#allocation4], 256
    $region37: #{tpu_custom_call.1} parent=1 // pred_fallthru
      _
    %145 = vsyncpa [#allocation4], 1

// kernel: tpu_custom_call.1
$region0: #{tpu_custom_call.1}
  #allocation0 [shape = 'u32[]', space=smem, size = 0x4, offset = 0x4, fixed_abs, tag = 'smem constant byte address 0x4 - core index']
  #allocation1 [shape = 'u32[72,128]{1,0:T(1,128)}', space=vmem, size = 0x9000, scoped, tag = 'internal scratch']
  #allocation2 [shape = 'f32[16,32]{1,0:T(8,128)}', space=vmem, size = 0x2000, scoped, tag = 'scratch operand']
  %s0 = inlined_call_operand.vmem [shape: f32[16,32], index: 0, kind: input, shape index: {}]
  %s1 = inlined_call_operand.vmem [shape: f32[32,128], index: 1, kind: input, shape index: {}]
  %s2 = inlined_call_operand.vmem [shape: f32[1,128], index: 2, kind: input, shape index: {}]
  %s3 = inlined_call_operand.vmem [shape: f32[128,32], index: 3, kind: input, shape index: {}]
  %s4 = inlined_call_operand.vmem [shape: f32[1,32], index: 4, kind: input, shape index: {}]
  %s5 = inlined_call_operand.hbm [shape: f32[16,32], index: 5, kind: output, shape index: {}]
  %s6 = sld [smem:[#allocation0]]
  $region38: #{tpu_custom_call.1} parent=0
    _
  %s8 = ssub.s32 1, %s6
  %s9 = scalar_select 0, %s8, %s6
  $region1: #{tpu_custom_call.1} parent=0
    #allocation3 [shape = 'u8[8192]{0}', space=vmem, size = 0x2000, scoped, tag = 'output window, operand 0, single buffered']
    #allocation4 [shape = 's32[1]{0}', space=sflag, size = 0x4, scoped, tag = 'scoped memory for tpu_custom_call.1']
    %10 = vsyncpa [#allocation4], 0
    // Predicated region
    $region2: #{tpu_custom_call.1} parent=1 // pred_check
      _
    $region3: #{tpu_custom_call.1} parent=1 // pred_check_branch
      %12 = sbr.rel (0) target = $region5
    $region4: #{tpu_custom_call.1} parent=1 // pred_region
      _
    $region5: #{tpu_custom_call.1} parent=1 // pred_fallthru
      _
    // Predicated region
    $region6: #{tpu_custom_call.1} parent=1 // pred_check
      _
    $region7: #{tpu_custom_call.1} parent=1 // pred_check_branch
      %14 = sbr.rel (0) target = $region9
    $region8: #{tpu_custom_call.1} parent=1 // pred_region
      _
    $region9: #{tpu_custom_call.1} parent=1 // pred_fallthru
      _
    // Predicated region
    $region10: #{tpu_custom_call.1} parent=1 // pred_check
      _
    $region11: #{tpu_custom_call.1} parent=1 // pred_check_branch
      %16 = sbr.rel (0) target = $region13
    $region12: #{tpu_custom_call.1} parent=1 // pred_region
      _
    $region13: #{tpu_custom_call.1} parent=1 // pred_fallthru
      _
    // Predicated region
    $region14: #{tpu_custom_call.1} parent=1 // pred_check
      _
    $region15: #{tpu_custom_call.1} parent=1 // pred_check_branch
      %18 = sbr.rel (0) target = $region17
    $region16: #{tpu_custom_call.1} parent=1 // pred_region
      _
    $region17: #{tpu_custom_call.1} parent=1 // pred_fallthru
      _
    // Predicated region
    $region18: #{tpu_custom_call.1} parent=1 // pred_check
      _
    $region19: #{tpu_custom_call.1} parent=1 // pred_check_branch
      %20 = sbr.rel (0) target = $region21
    $region20: #{tpu_custom_call.1} parent=1 // pred_region
      _
    $region21: #{tpu_custom_call.1} parent=1 // pred_fallthru
      _
    %p21 = scmp.eq.s32.totalorder 0, 0
    // Predicated region
    $region22: #{tpu_custom_call.1} parent=1 // pred_check
      %p22 = pneg %p21
    $region23: #{tpu_custom_call.1} parent=1 // pred_check_branch
      %24 = sbr.rel (%p22) target = $region25
    $region24: #{tpu_custom_call.1} parent=1 // pred_region
      %vm25 = vcmask 261120
      %26 = vst.msk [vmem:[#allocation2] sm:$0xff] %vm25, 0.0
      %27 = vst.msk [vmem:[#allocation2 + $0x8] sm:$0xff] %vm25, 0.0
    $region25: #{tpu_custom_call.1} parent=1 // pred_fallthru
      _
    %v28 = vld [vmem:[%s0] sm:$0xff]
    %v29 = vld [vmem:[%s0 + $0x8] sm:$0xff]
    %v30 = vld [vmem:[%s1] sm:$0xff]
    %v31 = vld [vmem:[%s1 + $0x8] sm:$0xff]
    %v32 = vld [vmem:[%s1 + $0x10] sm:$0xff]
    %v33 = vld [vmem:[%s1 + $0x18] sm:$0xff]
    %v34 = vld [vmem:[%s2] sm:$0x1]
    %v36 = vperm.slane %v34, 0
    %vm38 = vcmask 261120
    %v40 = vsel %vm38, %v28, 0
    %v43 = vsel %vm38, %v29, 0
    %45 = vmatpush.msra.mxu0 0.0
    %46 = vmatpush.msra.mxu0 0.0
    %47 = vmatpush.msra.mxu0 0.0
    %48 = vmatpush.msra.mxu0 0.0
    %49 = vmatpush.msra.mxu0 0.0
    %50 = vmatpush.msra.mxu0 0.0
    %51 = vmatpush.msra.mxu0 0.0
    %52 = vmatpush.msra.mxu0 0.0
    %53 = vmatpush.msra.mxu0 0.0
    %54 = vmatpush.msra.mxu0 0.0
    %55 = vmatpush.msra.mxu0 0.0
    %56 = vmatpush.msra.mxu0 0.0
    %57 = vmatpush.msra.mxu0 %v33
    %58 = vmatpush.msra.mxu0 %v32
    %59 = vmatpush.msra.mxu0 %v31
    %60 = vmatpush.msra.mxu0 %v30
    %61 = vmatmul.f32.gmra.mxu0 %v40
    %v62 = vpop.f32.mrf.mxu0
    %v63 = vadd.f32 %v36, %v62
    %64 = vmatmul.f32.gmra.mxu0 %v43
    %v65 = vpop.f32.mrf.mxu0
    %v66 = vadd.f32 %v36, %v65
    %67 = vdwg.mxu0
    %v68 = vmax.f32 %v63, 0.0
    %v69 = vmax.f32 %v66, 0.0
    %v70 = vld [vmem:[#allocation2] sm:$0xff]
    %v71 = vld [vmem:[#allocation2 + $0x8] sm:$0xff]
    %v72 = vld [vmem:[%s3] sm:$0xff]
    %v73 = vld [vmem:[%s3 + $0x8] sm:$0xff]
    %v74 = vld [vmem:[%s3 + $0x10] sm:$0xff]
    %v75 = vld [vmem:[%s3 + $0x18] sm:$0xff]
    %v76 = vld [vmem:[%s3 + $0x20] sm:$0xff]
    %v77 = vld [vmem:[%s3 + $0x28] sm:$0xff]
    %v78 = vld [vmem:[%s3 + $0x30] sm:$0xff]
    %v79 = vld [vmem:[%s3 + $0x38] sm:$0xff]
    %v80 = vld [vmem:[%s3 + $0x40] sm:$0xff]
    %v81 = vld [vmem:[%s3 + $0x48] sm:$0xff]
    %v82 = vld [vmem:[%s3 + $0x50] sm:$0xff]
    %v83 = vld [vmem:[%s3 + $0x58] sm:$0xff]
    %v84 = vld [vmem:[%s3 + $0x60] sm:$0xff]
    %v85 = vld [vmem:[%s3 + $0x68] sm:$0xff]
    %v86 = vld [vmem:[%s3 + $0x70] sm:$0xff]
    %v87 = vld [vmem:[%s3 + $0x78] sm:$0xff]
    %88 = vmatpush.msra.mxu0 %v87
    %89 = vmatpush.msra.mxu0 %v86
    %90 = vmatpush.msra.mxu0 %v85
    %91 = vmatpush.msra.mxu0 %v84
    %92 = vmatpush.msra.mxu0 %v83
    %93 = vmatpush.msra.mxu0 %v82
    %94 = vmatpush.msra.mxu0 %v81
    %95 = vmatpush.msra.mxu0 %v80
    %96 = vmatpush.msra.mxu0 %v79
    %97 = vmatpush.msra.mxu0 %v78
    %98 = vmatpush.msra.mxu0 %v77
    %99 = vmatpush.msra.mxu0 %v76
    %100 = vmatpush.msra.mxu0 %v75
    %101 = vmatpush.msra.mxu0 %v74
    %102 = vmatpush.msra.mxu0 %v73
    %103 = vmatpush.msra.mxu0 %v72
    %104 = vmatmul.f32.gmra.mxu0 %v68
    %v105 = vpop.f32.mrf.mxu0
    %v106 = vadd.f32 0.0, %v105
    %107 = vmatmul.f32.gmra.mxu0 %v69
    %v108 = vpop.f32.mrf.mxu0
    %v109 = vadd.f32 0.0, %v108
    %110 = vdwg.mxu0
    %v111 = vadd.f32 %v70, %v106
    %v112 = vadd.f32 %v71, %v109
    %113 = vst.msk [vmem:[#allocation2] sm:$0xff] %vm38, %v111
    %114 = vst.msk [vmem:[#allocation2 + $0x8] sm:$0xff] %vm38, %v112
    // Predicated region
    $region26: #{tpu_custom_call.1} parent=1 // pred_check
      %p115 = pneg %p21
    $region27: #{tpu_custom_call.1} parent=1 // pred_check_branch
      %117 = sbr.rel (%p115) target = $region29
    $region28: #{tpu_custom_call.1} parent=1 // pred_region
      %v118 = vld [vmem:[#allocation2] sm:$0xff]
      %v119 = vld [vmem:[#allocation2 + $0x8] sm:$0xff]
      %v120 = vld [vmem:[%s4] sm:$0x1]
      %v122 = vperm.slane %v120, 0
      %v124 = vadd.f32 %v118, %v122
      %v125 = vadd.f32 %v119, %v122
      %126 = vst.msk [vmem:[#allocation3] sm:$0xff] %vm38, %v124
      %127 = vst.msk [vmem:[#allocation3 + $0x8] sm:$0xff] %vm38, %v125
    $region29: #{tpu_custom_call.1} parent=1 // pred_fallthru
      _
    // Predicated region
    $region30: #{tpu_custom_call.1} parent=1 // pred_check
      _
    $region31: #{tpu_custom_call.1} parent=1 // pred_check_branch
      %129 = sbr.rel (0) target = $region33
    $region32: #{tpu_custom_call.1} parent=1 // pred_region
      %131 = vsyncadd [#allocation4], 0
      %s132 = sshll.u32 [#allocation3], 4
      %s133 = int_to_ptr.vmem [resolvable:$true] %s132
      %s134 = sshll.u32 %s5, 4
      %s135 = int_to_ptr.hbm [resolvable:$true] %s134
      %140 = dma.vmem_to_hbm [thread:$0]  %s133, 256, %s135, [#allocation4], 128, 128, 8
    $region33: #{tpu_custom_call.1} parent=1 // pred_fallthru
      _
    // Predicated region
    $region34: #{tpu_custom_call.1} parent=1 // pred_check
      _
    $region35: #{tpu_custom_call.1} parent=1 // pred_check_branch
      %142 = sbr.rel (0) target = $region37
    $region36: #{tpu_custom_call.1} parent=1 // pred_region
      %144 = dma.done [#allocation4], 256
    $region37: #{tpu_custom_call.1} parent=1 // pred_fallthru
      _
    %145 = vsyncpa [#allocation4], 1

</llo_original>
